<compile_context>
chip_gen: v7x
topology: tpu7x:2x2x1
jax: 0.10.0
libtpu: 0.0.40
codegen_flags: <defaults>
</compile_context>

<pallas_src>
import functools
import math

import jax
import jax.numpy as jnp
from jax.experimental import pallas as pl
from jax.experimental.pallas import tpu as pltpu

_LANE = 128


def _dice_sums_kernel(x_ref, lbl_ref, out_ref, *,
                      n_classes, apply_softmax, need_mask, total_pix):
    # x_ref  : (1, C, TR, 128)  scores (native dtype)
    # lbl_ref: (1, TR, 128)     int32 class labels (-1 in padded pixels)
    # out_ref: (1, 1, 3*C, 128) f32 lane-partial [intersect, y_sum, z_sum]
    j = pl.program_id(1)

    x = x_ref[0].astype(jnp.float32)          # (C, TR, 128)
    lbl = lbl_ref[0]                          # (TR, 128) int32
    tr, lane = lbl.shape

    if apply_softmax:
        # Fused channel softmax: exp goes to the EUP slot; one exact divide
        # per pixel for the normalization (not the bottleneck).
        m = jnp.max(x, axis=0, keepdims=True)
        e = jnp.exp(x - m)
        x = e * (1.0 / jnp.sum(e, axis=0, keepdims=True))

    if need_mask:
        # Only hit when softmax is on AND the sample has padded pixels:
        # softmax of the zero-padded logits is 1/C per class, which would
        # otherwise leak into z_sum.  Labels are -1 in padding, so intersect
        # and y_sum never need this mask.
        rows = jax.lax.broadcasted_iota(jnp.int32, (tr, lane), 0)
        lanes = jax.lax.broadcasted_iota(jnp.int32, (tr, lane), 1)
        pix = (j * tr + rows) * lane + lanes
        x = jnp.where((pix < total_pix)[None, :, :], x, 0.0)

    parts = []
    for c in range(n_classes):
        s = x[c]                              # (TR, 128) f32
        hit = lbl == c                        # padded pixels (-1) never hit
        inter = jnp.where(hit, s, 0.0)        # score * one_hot, no cast+mul
        t = hit.astype(jnp.float32)           # one_hot (t*t == t)
        parts.append(jnp.sum(inter, axis=0, keepdims=True))   # (1, 128)
        parts.append(jnp.sum(t, axis=0, keepdims=True))
        parts.append(jnp.sum(s * s, axis=0, keepdims=True))

    # Single unmasked full-block store of the (3*C, 128) lane partials.
    out_ref[0, 0] = jnp.concatenate(parts, axis=0)


def dice_loss(inputs, target, n_classes, weight=None, softmax=False):
    """Matches DiceLoss.forward semantics (returns a scalar loss)."""
    N, C, H, W = inputs.shape
    assert C == n_classes, (inputs.shape, n_classes)

    P = H * W
    R = -(-P // _LANE)                       # rows of 128 lanes per sample

    # ---- Tile sizing: budget counts double-buffered inputs + f32 temps. ----
    in_bytes = jnp.dtype(inputs.dtype).itemsize
    per_row = (2 * C * _LANE * in_bytes          # score block, double-buffered
               + 2 * _LANE * 4                   # label block, double-buffered
               + 4 * C * _LANE * 4)              # in-kernel f32 temporaries
    budget = 16 * 1024 * 1024
    tr_max = max(8, min(2048, (budget // per_row) // 8 * 8))

    # Balance the tile size so row tiles divide the padded row count evenly
    # (avoids paying up to a full extra tile of padded DMA/compute).
    n_row_tiles = max(1, -(-R // tr_max))
    TR = ((math.ceil(R / n_row_tiles) + 7) // 8) * 8
    Rpad = n_row_tiles * TR
    Ppad = Rpad * _LANE

    scores = inputs.reshape(N, C, P)             # free reshape, NCHW order kept
    labels = target.astype(jnp.int32).reshape(N, P)
    if Ppad != P:
        # One-time pad: scores -> 0 (zero contribution without softmax),
        # labels -> -1 (never matches any class).  Also guarantees the kernel
        # never reads stale out-of-bounds rows.
        scores = jnp.pad(scores, ((0, 0), (0, 0), (0, Ppad - P)))
        labels = jnp.pad(labels, ((0, 0), (0, Ppad - P)), constant_values=-1)
    scores = scores.reshape(N, C, Rpad, _LANE)
    labels = labels.reshape(N, Rpad, _LANE)

    need_mask = bool(softmax) and (Ppad != P)

    kernel = functools.partial(
        _dice_sums_kernel, n_classes=C, apply_softmax=bool(softmax),
        need_mask=need_mask, total_pix=P)

    sums = pl.pallas_call(
        kernel,
        out_shape=jax.ShapeDtypeStruct((N, n_row_tiles, 3 * C, _LANE),
                                       jnp.float32),
        grid=(N, n_row_tiles),
        in_specs=[
            pl.BlockSpec((1, C, TR, _LANE), lambda n, j: (n, 0, j, 0)),
            pl.BlockSpec((1, TR, _LANE), lambda n, j: (n, j, 0)),
        ],
        out_specs=pl.BlockSpec((1, 1, 3 * C, _LANE), lambda n, j: (n, j, 0, 0)),
        compiler_params=pltpu.CompilerParams(
            dimension_semantics=("parallel", "parallel"),
            vmem_limit_bytes=32 * 1024 * 1024),
    )(scores, labels)

    # Finish the reduction in XLA: sum over batch, row tiles, and lanes.
    tot = jnp.sum(sums, axis=(0, 1, 3)).reshape(C, 3)
    intersect, y_sum, z_sum = tot[:, 0], tot[:, 1], tot[:, 2]
    smooth = 1e-05
    dice = 1.0 - (2.0 * intersect + smooth) / (z_sum + y_sum + smooth)

    if weight is None:
        weight = [1.0] * n_classes
    w = jnp.asarray(weight, dtype=jnp.float32)
    loss = jnp.sum(dice * w)
    wsum = float(sum(weight))
    return loss / wsum if wsum != 0 else loss


def _dice_loss_ref(inputs, target, n_classes, weight=None, softmax=False):
    """Pure-JAX reference mirroring the PyTorch module (for verification)."""
    if softmax:
        inputs = jax.nn.softmax(inputs, axis=1)
    if weight is None:
        weight = [1.0] * n_classes
    smooth = 1e-05
    loss = 0.0
    for i in range(n_classes):
        s = inputs[:, i].astype(jnp.float32)
        t = (target == i).astype(jnp.float32)
        intersect = jnp.sum(s * t)
        y_sum = jnp.sum(t * t)
        z_sum = jnp.sum(s * s)
        dice = 1.0 - (2.0 * intersect + smooth) / (z_sum + y_sum + smooth)
        loss = loss + dice * weight[i]
    wsum = sum(weight)
    return loss / wsum if wsum != 0 else loss


if __name__ == "__main__":
    # Primary check: logits + fused softmax (exercises the softmax+pad mask,
    # since H*W=256 pads to a full 8-row tile).
    N, C, H, W = 2, 4, 16, 16
    key = jax.random.PRNGKey(0)
    k1, k2 = jax.random.split(key)
    inputs = jax.random.normal(k1, (N, C, H, W), dtype=jnp.float32)
    target = jax.random.randint(k2, (N, H, W), 0, C, dtype=jnp.int32)

    loss = jax.block_until_ready(dice_loss(inputs, target, n_classes=C, softmax=True))
    ref = _dice_loss_ref(inputs, target, n_classes=C, softmax=True)
    assert jnp.allclose(loss, ref, rtol=1e-5, atol=1e-5), (loss, ref)

    # Secondary check: softmax=False, non-uniform weights, H*W not a multiple
    # of 128 (exercises the zero-pad / label=-1 path with no in-kernel mask).
    N2, C2, H2, W2 = 1, 3, 10, 12
    k3, k4 = jax.random.split(k2)
    probs = jax.nn.softmax(jax.random.normal(k3, (N2, C2, H2, W2), jnp.float32), axis=1)
    tgt2 = jax.random.randint(k4, (N2, H2, W2), 0, C2, dtype=jnp.int32)
    w2 = [0.2, 0.3, 0.5]
    loss2 = jax.block_until_ready(
        dice_loss(probs, tgt2, n_classes=C2, weight=w2, softmax=False))
    ref2 = _dice_loss_ref(probs, tgt2, n_classes=C2, weight=w2, softmax=False)
    assert jnp.allclose(loss2, ref2, rtol=1e-5, atol=1e-5), (loss2, ref2)

    print("KERNEL_OK")
</pallas_src>

<mosaic_0001>
module attributes {stable_mosaic.version = 11 : i64} {
  func.func @_dice_sums_kernel(%arg0: i32, %arg1: i32, %arg2: memref<1x4x8x128xf32, #tpu.memory_space<vmem>>, %arg3: memref<1x8x128xi32, #tpu.memory_space<vmem>>, %arg4: memref<1x1x12x128xf32, #tpu.memory_space<vmem>>) attributes {dimension_semantics = [#tpu.dimension_semantics<parallel>, #tpu.dimension_semantics<parallel>], iteration_bounds = array<i64: 2, 1>, scalar_prefetch = 0 : i64, scratch_operands = 0 : i64, tpu.core_type = #tpu.core_type<tc>, window_params = [{transform_indices = @transform_0, window_bounds = array<i64: 1, 4, 8, 128>}, {transform_indices = @transform_1, window_bounds = array<i64: 1, 8, 128>}, {transform_indices = @transform_2, window_bounds = array<i64: 1, 1, 12, 128>}]} {
    %c0 = arith.constant 0 : index
    %c0_0 = arith.constant 0 : index
    %c0_1 = arith.constant 0 : index
    %c0_2 = arith.constant 0 : index
    %0 = vector.load %arg2[%c0, %c0_0, %c0_1, %c0_2] : memref<1x4x8x128xf32, #tpu.memory_space<vmem>>, vector<1x4x8x128xf32>
    %1 = vector.shape_cast %0 : vector<1x4x8x128xf32> to vector<4x8x128xf32>
    %c0_3 = arith.constant 0 : index
    %c0_4 = arith.constant 0 : index
    %c0_5 = arith.constant 0 : index
    %2 = vector.load %arg3[%c0_3, %c0_4, %c0_5] : memref<1x8x128xi32, #tpu.memory_space<vmem>>, vector<1x8x128xi32>
    %3 = vector.shape_cast %2 : vector<1x8x128xi32> to vector<8x128xi32>
    %cst = arith.constant dense<0xFF800000> : vector<8x128xf32>
    %4 = vector.multi_reduction <maximumf>, %1, %cst [0] : vector<4x8x128xf32> to vector<8x128xf32>
    %5 = vector.shape_cast %4 : vector<8x128xf32> to vector<1x8x128xf32>
    %6 = vector.broadcast %5 : vector<1x8x128xf32> to vector<4x8x128xf32>
    %7 = arith.subf %1, %6 : vector<4x8x128xf32>
    %8 = math.exp %7 : vector<4x8x128xf32>
    %cst_6 = arith.constant dense<0.000000e+00> : vector<8x128xf32>
    %9 = vector.multi_reduction <add>, %8, %cst_6 [0] : vector<4x8x128xf32> to vector<8x128xf32>
    %10 = vector.shape_cast %9 : vector<8x128xf32> to vector<1x8x128xf32>
    %cst_7 = arith.constant 1.000000e+00 : f32
    %11 = vector.broadcast %cst_7 : f32 to vector<1x8x128xf32>
    %12 = arith.divf %11, %10 : vector<1x8x128xf32>
    %13 = vector.broadcast %12 : vector<1x8x128xf32> to vector<4x8x128xf32>
    %14 = arith.mulf %8, %13 : vector<4x8x128xf32>
    %15 = tpu.iota {dimensions = array<i32: 0>} : vector<8x128xi32>
    %16 = tpu.iota {dimensions = array<i32: 1>} : vector<8x128xi32>
    %c8_i32 = arith.constant 8 : i32
    %17 = arith.muli %arg1, %c8_i32 : i32
    %18 = vector.broadcast %17 : i32 to vector<8x128xi32>
    %19 = arith.addi %18, %15 : vector<8x128xi32>
    %c128_i32 = arith.constant 128 : i32
    %20 = vector.broadcast %c128_i32 : i32 to vector<8x128xi32>
    %21 = arith.muli %19, %20 : vector<8x128xi32>
    %22 = arith.addi %21, %16 : vector<8x128xi32>
    %c256_i32 = arith.constant 256 : i32
    %23 = vector.broadcast %c256_i32 : i32 to vector<8x128xi32>
    %24 = arith.cmpi slt, %22, %23 : vector<8x128xi32>
    %25 = vector.shape_cast %24 : vector<8x128xi1> to vector<1x8x128xi1>
    %cst_8 = arith.constant 0.000000e+00 : f32
    %26 = vector.shape_cast %25 : vector<1x8x128xi1> to vector<1x8x128xi1>
    %27 = vector.broadcast %26 : vector<1x8x128xi1> to vector<4x8x128xi1>
    %28 = vector.broadcast %cst_8 : f32 to vector<4x8x128xf32>
    %29 = arith.select %27, %14, %28 : vector<4x8x128xi1>, vector<4x8x128xf32>
    %30 = vector.extract_strided_slice %29 {offsets = [0, 0, 0], sizes = [1, 8, 128], strides = [1, 1, 1]} : vector<4x8x128xf32> to vector<1x8x128xf32>
    %31 = vector.shape_cast %30 : vector<1x8x128xf32> to vector<8x128xf32>
    %c0_i32 = arith.constant 0 : i32
    %32 = vector.broadcast %c0_i32 : i32 to vector<8x128xi32>
    %33 = arith.cmpi eq, %3, %32 : vector<8x128xi32>
    %cst_9 = arith.constant 0.000000e+00 : f32
    %34 = vector.broadcast %cst_9 : f32 to vector<8x128xf32>
    %35 = arith.select %33, %31, %34 : vector<8x128xi1>, vector<8x128xf32>
    %36 = arith.extui %33 : vector<8x128xi1> to vector<8x128xi32>
    %37 = arith.sitofp %36 : vector<8x128xi32> to vector<8x128xf32>
    %cst_10 = arith.constant dense<0.000000e+00> : vector<128xf32>
    %38 = vector.multi_reduction <add>, %35, %cst_10 [0] : vector<8x128xf32> to vector<128xf32>
    %39 = vector.shape_cast %38 : vector<128xf32> to vector<1x128xf32>
    %cst_11 = arith.constant dense<0.000000e+00> : vector<128xf32>
    %40 = vector.multi_reduction <add>, %37, %cst_11 [0] : vector<8x128xf32> to vector<128xf32>
    %41 = vector.shape_cast %40 : vector<128xf32> to vector<1x128xf32>
    %42 = arith.mulf %31, %31 : vector<8x128xf32>
    %cst_12 = arith.constant dense<0.000000e+00> : vector<128xf32>
    %43 = vector.multi_reduction <add>, %42, %cst_12 [0] : vector<8x128xf32> to vector<128xf32>
    %44 = vector.shape_cast %43 : vector<128xf32> to vector<1x128xf32>
    %45 = vector.extract_strided_slice %29 {offsets = [1, 0, 0], sizes = [1, 8, 128], strides = [1, 1, 1]} : vector<4x8x128xf32> to vector<1x8x128xf32>
    %46 = vector.shape_cast %45 : vector<1x8x128xf32> to vector<8x128xf32>
    %c1_i32 = arith.constant 1 : i32
    %47 = vector.broadcast %c1_i32 : i32 to vector<8x128xi32>
    %48 = arith.cmpi eq, %3, %47 : vector<8x128xi32>
    %cst_13 = arith.constant 0.000000e+00 : f32
    %49 = vector.broadcast %cst_13 : f32 to vector<8x128xf32>
    %50 = arith.select %48, %46, %49 : vector<8x128xi1>, vector<8x128xf32>
    %51 = arith.extui %48 : vector<8x128xi1> to vector<8x128xi32>
    %52 = arith.sitofp %51 : vector<8x128xi32> to vector<8x128xf32>
    %cst_14 = arith.constant dense<0.000000e+00> : vector<128xf32>
    %53 = vector.multi_reduction <add>, %50, %cst_14 [0] : vector<8x128xf32> to vector<128xf32>
    %54 = vector.shape_cast %53 : vector<128xf32> to vector<1x128xf32>
    %cst_15 = arith.constant dense<0.000000e+00> : vector<128xf32>
    %55 = vector.multi_reduction <add>, %52, %cst_15 [0] : vector<8x128xf32> to vector<128xf32>
    %56 = vector.shape_cast %55 : vector<128xf32> to vector<1x128xf32>
    %57 = arith.mulf %46, %46 : vector<8x128xf32>
    %cst_16 = arith.constant dense<0.000000e+00> : vector<128xf32>
    %58 = vector.multi_reduction <add>, %57, %cst_16 [0] : vector<8x128xf32> to vector<128xf32>
    %59 = vector.shape_cast %58 : vector<128xf32> to vector<1x128xf32>
    %60 = vector.extract_strided_slice %29 {offsets = [2, 0, 0], sizes = [1, 8, 128], strides = [1, 1, 1]} : vector<4x8x128xf32> to vector<1x8x128xf32>
    %61 = vector.shape_cast %60 : vector<1x8x128xf32> to vector<8x128xf32>
    %c2_i32 = arith.constant 2 : i32
    %62 = vector.broadcast %c2_i32 : i32 to vector<8x128xi32>
    %63 = arith.cmpi eq, %3, %62 : vector<8x128xi32>
    %cst_17 = arith.constant 0.000000e+00 : f32
    %64 = vector.broadcast %cst_17 : f32 to vector<8x128xf32>
    %65 = arith.select %63, %61, %64 : vector<8x128xi1>, vector<8x128xf32>
    %66 = arith.extui %63 : vector<8x128xi1> to vector<8x128xi32>
    %67 = arith.sitofp %66 : vector<8x128xi32> to vector<8x128xf32>
    %cst_18 = arith.constant dense<0.000000e+00> : vector<128xf32>
    %68 = vector.multi_reduction <add>, %65, %cst_18 [0] : vector<8x128xf32> to vector<128xf32>
    %69 = vector.shape_cast %68 : vector<128xf32> to vector<1x128xf32>
    %cst_19 = arith.constant dense<0.000000e+00> : vector<128xf32>
    %70 = vector.multi_reduction <add>, %67, %cst_19 [0] : vector<8x128xf32> to vector<128xf32>
    %71 = vector.shape_cast %70 : vector<128xf32> to vector<1x128xf32>
    %72 = arith.mulf %61, %61 : vector<8x128xf32>
    %cst_20 = arith.constant dense<0.000000e+00> : vector<128xf32>
    %73 = vector.multi_reduction <add>, %72, %cst_20 [0] : vector<8x128xf32> to vector<128xf32>
    %74 = vector.shape_cast %73 : vector<128xf32> to vector<1x128xf32>
    %75 = vector.extract_strided_slice %29 {offsets = [3, 0, 0], sizes = [1, 8, 128], strides = [1, 1, 1]} : vector<4x8x128xf32> to vector<1x8x128xf32>
    %76 = vector.shape_cast %75 : vector<1x8x128xf32> to vector<8x128xf32>
    %c3_i32 = arith.constant 3 : i32
    %77 = vector.broadcast %c3_i32 : i32 to vector<8x128xi32>
    %78 = arith.cmpi eq, %3, %77 : vector<8x128xi32>
    %cst_21 = arith.constant 0.000000e+00 : f32
    %79 = vector.broadcast %cst_21 : f32 to vector<8x128xf32>
    %80 = arith.select %78, %76, %79 : vector<8x128xi1>, vector<8x128xf32>
    %81 = arith.extui %78 : vector<8x128xi1> to vector<8x128xi32>
    %82 = arith.sitofp %81 : vector<8x128xi32> to vector<8x128xf32>
    %cst_22 = arith.constant dense<0.000000e+00> : vector<128xf32>
    %83 = vector.multi_reduction <add>, %80, %cst_22 [0] : vector<8x128xf32> to vector<128xf32>
    %84 = vector.shape_cast %83 : vector<128xf32> to vector<1x128xf32>
    %cst_23 = arith.constant dense<0.000000e+00> : vector<128xf32>
    %85 = vector.multi_reduction <add>, %82, %cst_23 [0] : vector<8x128xf32> to vector<128xf32>
    %86 = vector.shape_cast %85 : vector<128xf32> to vector<1x128xf32>
    %87 = arith.mulf %76, %76 : vector<8x128xf32>
    %cst_24 = arith.constant dense<0.000000e+00> : vector<128xf32>
    %88 = vector.multi_reduction <add>, %87, %cst_24 [0] : vector<8x128xf32> to vector<128xf32>
    %89 = vector.shape_cast %88 : vector<128xf32> to vector<1x128xf32>
    %90 = tpu.concatenate %39, %41, %44, %54, %56, %59, %69, %71, %74, %84, %86, %89 in 0 : vector<1x128xf32>, vector<1x128xf32>, vector<1x128xf32>, vector<1x128xf32>, vector<1x128xf32>, vector<1x128xf32>, vector<1x128xf32>, vector<1x128xf32>, vector<1x128xf32>, vector<1x128xf32>, vector<1x128xf32>, vector<1x128xf32> -> vector<12x128xf32>
    %c0_25 = arith.constant 0 : index
    %c0_26 = arith.constant 0 : index
    %c0_27 = arith.constant 0 : index
    %c0_28 = arith.constant 0 : index
    %91 = vector.load %arg4[%c0_25, %c0_26, %c0_27, %c0_28] : memref<1x1x12x128xf32, #tpu.memory_space<vmem>>, vector<1x1x12x128xf32>
    %92 = vector.shape_cast %91 : vector<1x1x12x128xf32> to vector<12x128xf32>
    %93 = vector.shape_cast %90 : vector<12x128xf32> to vector<1x1x12x128xf32>
    tpu.vector_store %arg4[%c0_25, %c0_26, %c0_27, %c0_28], %93 {strides = array<i32>} : memref<1x1x12x128xf32, #tpu.memory_space<vmem>>, vector<1x1x12x128xf32>,
    return
  }
  func.func @transform_0(%arg0: i32, %arg1: i32) -> (i32, i32, i32, i32) {
    %c0_i32 = arith.constant 0 : i32
    %c0_i32_0 = arith.constant 0 : i32
    %c0_i32_1 = arith.constant 0 : i32
    return %arg0, %c0_i32, %arg1, %c0_i32_0 : i32, i32, i32, i32
  }
  func.func @transform_1(%arg0: i32, %arg1: i32) -> (i32, i32, i32) {
    %c0_i32 = arith.constant 0 : i32
    %c0_i32_0 = arith.constant 0 : i32
    return %arg0, %arg1, %c0_i32 : i32, i32, i32
  }
  func.func @transform_2(%arg0: i32, %arg1: i32) -> (i32, i32, i32, i32) {
    %c0_i32 = arith.constant 0 : i32
    %c0_i32_0 = arith.constant 0 : i32
    %c0_i32_1 = arith.constant 0 : i32
    return %arg0, %arg1, %c0_i32, %c0_i32_0 : i32, i32, i32, i32
  }
}

</mosaic_0001>

<llo_original>
// kernel: tpu_custom_call.1
$region0: #{tpu_custom_call.1}
  #allocation0 [shape = 'u32[]', space=smem, size = 0x4, offset = 0x4, fixed_abs, tag = 'smem constant byte address 0x4 - core index']
  #allocation1 [shape = 'u32[144,128]{1,0:T(1,128)}', space=vmem, size = 0x12000, scoped, tag = 'internal scratch']
  %s0 = inlined_call_operand.hbm [shape: f32[2,4,8,128], index: 0, kind: input, shape index: {}]
  %s1 = inlined_call_operand.hbm [shape: s32[2,8,128], index: 1, kind: input, shape index: {}]
  %s2 = inlined_call_operand.vmem [shape: f32[2,1,12,128], index: 2, kind: output, shape index: {}]
  %s3 = sld [smem:[#allocation0]]
  $region49: #{tpu_custom_call.1} parent=0
    _
  %s5 = ssub.s32 1, %s3
  %s6 = scalar_select 0, %s5, %s3
  $region1: #{tpu_custom_call.1} parent=0
    #allocation2 [shape = 'u8[32768]{0}', space=vmem, size = 0x8000, scoped, tag = 'input window, operand 0']
    #allocation3 [shape = 's32[2]{0}', space=sflag, size = 0x8, scoped, tag = 'scoped memory for tpu_custom_call.1']
    #allocation4 [shape = 'u8[8192]{0}', space=vmem, size = 0x2000, scoped, tag = 'input window, operand 1']
    #allocation5 [shape = 's32[2]{0}', space=sflag, size = 0x8, scoped, tag = 'scoped memory for tpu_custom_call.1']
    %7 = vsyncpa [#allocation3], 0
    %s8 = scalar_lea.sflag [#allocation3], 1
    %9 = vsyncpa %s8, 0
    %10 = vsyncpa [#allocation5], 0
    %s11 = scalar_lea.sflag [#allocation5], 1
    %12 = vsyncpa %s11, 0
    loop: start=0, step=1, limit=4
    $region2: #{tpu_custom_call.1} parent=1 // loop_pre_header
      _
    $region3: #{tpu_custom_call.1} parent=1 // loop_header
      %s14 = sphi 0, %s18
      %p15 = scmp.ge.s32.totalorder %s14, 4
      %s21 = sphi 0, %s33
      %s22 = sphi 0, %s29
      %s23 = sphi 0, %s21
      %s24 = sphi 0, %s22
      %s25 = sphi 0, %s23
      %s26 = sphi 0, %s24
      %s38 = sphi 0, %s40
      %s41 = sphi 0, %s38
      %s42 = sphi 0, %s41
      %s58 = sphi 0, %s42
      %s66 = sphi 0, %s68
      %s69 = sphi 0, %s66
      %s70 = sphi 0, %s69
      %s86 = sphi 0, %s70
      %s94 = sphi 0, %s96
      %s97 = sphi 0, %s94
      %s98 = sphi 0, %s97
      %s114 = sphi 0, %s98
    $region4: #{tpu_custom_call.1} parent=1 // loop_header_branch
      %17 = sbr.rel (%p15) target = $region8
    $region5: #{tpu_custom_call.1} parent=1 // loop_body
      %s19 = ssub.s32 %s14, 1
      %s20 = ssub.s32 %s14, 2
      %s27 = sadd.s32 1, %s22
      %p28 = scmp.ge.s32.totalorder %s27, 1
      %s29 = scalar_select %p28, 0, %s27
      %s30 = sadd.s32 1, %s21
      %s31 = scalar_select %p28, %s30, %s21
      %p32 = scmp.ge.s32.totalorder %s31, 2
      %s33 = scalar_select %p32, 0, %s31
      %s34 = ssub.s32 %s21, %s33
      %s35 = ssub.s32 %s22, %s29
      %s36 = sor.u32 %s34, %s35
      %p37 = scmp.eq.s32.totalorder %s36, 0
      %s39 = sadd.s32 %s38, 1
      %s40 = scalar_select %p37, %s38, %s39
      %p43 = pneg %p37
      %p44 = scmp.eq.s32.totalorder %s14, 1
      %p45 = por %p43, %p44
      %p46 = scmp.ne.s32.totalorder %s38, %s41
      %p47 = scmp.eq.s32.totalorder %s14, 0
      %p48 = por %p46, %p47
      %p49 = scmp.ne.s32.totalorder %s38, %s41
      %p50 = scmp.eq.s32.totalorder %s19, 1
      %p51 = por %p49, %p50
      %p52 = scmp.ne.s32.totalorder %s41, %s42
      %p53 = scmp.eq.s32.totalorder %s19, 0
      %p54 = por %p52, %p53
      %p55 = scmp.ne.s32.totalorder %s41, %s42
      %p56 = scmp.eq.s32.totalorder %s20, 1
      %p57 = por %p55, %p56
      %p59 = scmp.ne.s32.totalorder %s42, %s58
      %p60 = scmp.eq.s32.totalorder %s20, 0
      %p61 = por %p59, %p60
      %s62 = ssub.s32 %s21, %s33
      %s63 = ssub.s32 %s22, %s29
      %s64 = sor.u32 %s62, %s63
      %p65 = scmp.eq.s32.totalorder %s64, 0
      %s67 = sadd.s32 %s66, 1
      %s68 = scalar_select %p65, %s66, %s67
      %p71 = pneg %p65
      %p72 = scmp.eq.s32.totalorder %s14, 1
      %p73 = por %p71, %p72
      %p74 = scmp.ne.s32.totalorder %s66, %s69
      %p75 = scmp.eq.s32.totalorder %s14, 0
      %p76 = por %p74, %p75
      %p77 = scmp.ne.s32.totalorder %s66, %s69
      %p78 = scmp.eq.s32.totalorder %s19, 1
      %p79 = por %p77, %p78
      %p80 = scmp.ne.s32.totalorder %s69, %s70
      %p81 = scmp.eq.s32.totalorder %s19, 0
      %p82 = por %p80, %p81
      %p83 = scmp.ne.s32.totalorder %s69, %s70
      %p84 = scmp.eq.s32.totalorder %s20, 1
      %p85 = por %p83, %p84
      %p87 = scmp.ne.s32.totalorder %s70, %s86
      %p88 = scmp.eq.s32.totalorder %s20, 0
      %p89 = por %p87, %p88
      %s90 = ssub.s32 %s21, %s33
      %s91 = ssub.s32 %s22, %s29
      %s92 = sor.u32 %s90, %s91
      %p93 = scmp.eq.s32.totalorder %s92, 0
      %s95 = sadd.s32 %s94, 1
      %s96 = scalar_select %p93, %s94, %s95
      %p99 = pneg %p93
      %p100 = scmp.eq.s32.totalorder %s14, 1
      %p101 = por %p99, %p100
      %p102 = scmp.ne.s32.totalorder %s94, %s97
      %p103 = scmp.eq.s32.totalorder %s14, 0
      %p104 = por %p102, %p103
      %p105 = scmp.ne.s32.totalorder %s94, %s97
      %p106 = scmp.eq.s32.totalorder %s19, 1
      %p107 = por %p105, %p106
      %p108 = scmp.ne.s32.totalorder %s97, %s98
      %p109 = scmp.eq.s32.totalorder %s19, 0
      %p110 = por %p108, %p109
      %p111 = scmp.ne.s32.totalorder %s97, %s98
      %p112 = scmp.eq.s32.totalorder %s20, 1
      %p113 = por %p111, %p112
      %p115 = scmp.ne.s32.totalorder %s98, %s114
      %p116 = scmp.eq.s32.totalorder %s20, 0
      %p117 = por %p115, %p116
      %p118 = scmp.le.s32.totalorder 1, %s14
      %p119 = scmp.lt.s32.totalorder %s14, 3
      %p120 = pnand %p118, %p119
      %p121 = pneg %p120
      // Predicated region
      $region9: #{tpu_custom_call.1} parent=5 // pred_check
        _
      $region10: #{tpu_custom_call.1} parent=5 // pred_check_branch
        %123 = sbr.rel (%p120) target = $region12
      $region11: #{tpu_custom_call.1} parent=5 // pred_region
        %s124 = ssub.s32 %s14, 1
      $region12: #{tpu_custom_call.1} parent=5 // pred_fallthru
        _
      %p125 = scmp.lt.s32.totalorder %s14, 2
      // Predicated region
      $region13: #{tpu_custom_call.1} parent=5 // pred_check
        %p126 = pneg %p125
      $region14: #{tpu_custom_call.1} parent=5 // pred_check_branch
        %128 = sbr.rel (%p126) target = $region16
      $region15: #{tpu_custom_call.1} parent=5 // pred_region
        // Predicated region
        $region17: #{tpu_custom_call.1} parent=15 // pred_check
          %p129 = pneg %p48
        $region18: #{tpu_custom_call.1} parent=15 // pred_check_branch
          %131 = sbr.rel (%p129) target = $region20
        $region19: #{tpu_custom_call.1} parent=15 // pred_region
          %s132 = sand.u32 %s38, 1
          %s133 = scalar_lea.sflag [#allocation3], %s132
          %s134 = sand.u32 %s38, 1
          %s135 = smul.addr %s134, 32
          %s136 = scalar_lea.vmem [#allocation2], %s135
          %s138 = ssub.s32 512, 512
          %139 = vsyncadd %s133, %s138
          %s140 = smul.addr %s21, 4
          %s141 = sadd.s32 %s22, %s140
          %s142 = smul.addr %s141, 128
          %s143 = scalar_lea.hbm %s0, %s142
          %s144 = sshll.u32 %s136, 4
          %s145 = int_to_ptr.vmem [resolvable:$true] %s144
          %150 = dma.hbm_to_vmem [thread:$0]  %s143, 512, %s145, %s133, 128, 128, 8
        $region20: #{tpu_custom_call.1} parent=15 // pred_fallthru
          _
        // Predicated region
        $region21: #{tpu_custom_call.1} parent=15 // pred_check
          %p151 = pneg %p76
        $region22: #{tpu_custom_call.1} parent=15 // pred_check_branch
          %153 = sbr.rel (%p151) target = $region24
        $region23: #{tpu_custom_call.1} parent=15 // pred_region
          %s154 = sand.u32 %s66, 1
          %s155 = scalar_lea.sflag [#allocation5], %s154
          %s156 = sand.u32 %s66, 1
          %s157 = smul.addr %s156, 8
          %s158 = scalar_lea.vmem [#allocation4], %s157
          %s160 = ssub.s32 128, 128
          %161 = vsyncadd %s155, %s160
          %s162 = sadd.s32 %s22, %s21
          %s163 = smul.addr %s162, 128
          %s164 = scalar_lea.hbm %s1, %s163
          %s166 = sshll.u32 %s158, 4
          %s167 = int_to_ptr.vmem [resolvable:$true] %s166
          %169 = dma.hbm_to_vmem [thread:$0]  %s164, 128, %s167, %s155
        $region24: #{tpu_custom_call.1} parent=15 // pred_fallthru
          _
      $region16: #{tpu_custom_call.1} parent=5 // pred_fallthru
        _
      %p170 = scmp.le.s32.totalorder 1, %s14
      %p171 = scmp.lt.s32.totalorder %s14, 3
      %p172 = pnand %p170, %p171
      %p173 = pneg %p172
      // Predicated region
      $region25: #{tpu_custom_call.1} parent=5 // pred_check
        _
      $region26: #{tpu_custom_call.1} parent=5 // pred_check_branch
        %175 = sbr.rel (%p172) target = $region28
      $region27: #{tpu_custom_call.1} parent=5 // pred_region
        %s176 = ssub.s32 %s14, 1
        %s177 = sand.u32 %s41, 1
        %s178 = scalar_lea.sflag [#allocation3], %s177
        %s179 = sand.u32 %s41, 1
        %s180 = smul.addr %s179, 32
        %s181 = scalar_lea.vmem [#allocation2], %s180
        // Predicated region
        $region29: #{tpu_custom_call.1} parent=27 // pred_check
          %p182 = pneg %p54
        $region30: #{tpu_custom_call.1} parent=27 // pred_check_branch
          %184 = sbr.rel (%p182) target = $region32
        $region31: #{tpu_custom_call.1} parent=27 // pred_region
          %185 = dma.done %s178, 512
        $region32: #{tpu_custom_call.1} parent=27 // pred_fallthru
          _
        %s186 = sand.u32 %s69, 1
        %s187 = scalar_lea.sflag [#allocation5], %s186
        %s188 = sand.u32 %s69, 1
        %s189 = smul.addr %s188, 8
        %s190 = scalar_lea.vmem [#allocation4], %s189
        // Predicated region
        $region33: #{tpu_custom_call.1} parent=27 // pred_check
          %p191 = pneg %p82
        $region34: #{tpu_custom_call.1} parent=27 // pred_check_branch
          %193 = sbr.rel (%p191) target = $region36
        $region35: #{tpu_custom_call.1} parent=27 // pred_region
          %194 = dma.done %s187, 128
        $region36: #{tpu_custom_call.1} parent=27 // pred_fallthru
          _
        %s195 = sand.u32 %s41, 1
        %s196 = scalar_lea.sflag [#allocation3], %s195
        %s197 = sand.u32 %s41, 1
        %s198 = smul.addr %s197, 32
        %s199 = scalar_lea.vmem [#allocation2], %s198
        %p200 = pneg %p54
        %p201 = pneg %p51
        %s202 = sand.u32 %s69, 1
        %s203 = scalar_lea.sflag [#allocation5], %s202
        %s204 = sand.u32 %s69, 1
        %s205 = smul.addr %s204, 8
        %s206 = scalar_lea.vmem [#allocation4], %s205
        %p207 = pneg %p82
        %p208 = pneg %p79
        %p209 = pneg %p110
        %p210 = pneg %p107
        %p211 = scmp.lt.s32.totalorder %s23, 1
        %s212 = scalar_select %p211, %s23, 1
        %p213 = scmp.lt.s32.totalorder %s24, 0
        %s214 = scalar_select %p213, %s24, 0
        %s215 = smul.addr %s214, 2
        %s216 = smul.addr %s212, 2
        %s217 = sadd.s32 %s215, %s216
        %s218 = smul.addr %s217, 8
        %s219 = scalar_lea.vmem %s2, %s218
        %p220 = scmp.lt.s32.totalorder %s23, 1
        %s221 = scalar_select %p220, %s23, 1
        %p222 = scmp.lt.s32.totalorder %s24, 0
        %s223 = scalar_select %p222, %s24, 0
        %s224 = smul.addr %s223, 2
        %s225 = smul.addr %s221, 2
        %s226 = sadd.s32 %s224, %s225
        %s227 = smul.addr %s226, 8
        %s228 = scalar_lea.vmem %s2, %s227
        %v229 = vld [vmem:[%s181] sm:$0xff]
        %v230 = vld [vmem:[%s181 + $0x8] sm:$0xff]
        %v231 = vld [vmem:[%s181 + $0x10] sm:$0xff]
        %v232 = vld [vmem:[%s181 + $0x18] sm:$0xff]
        %v233 = vld [vmem:[%s190] sm:$0xff]
        %v234 = vmax.f32 %v229, %v230
        %v235 = vmax.f32 %v231, %v232
        %v236 = vmax.f32 %v234, %v235
        %v237 = vsub.f32 %v229, %v236
        %v238 = vsub.f32 %v230, %v236
        %v239 = vsub.f32 %v231, %v236
        %v240 = vsub.f32 %v232, %v236
        %v241 = vmul.f32 %v237, 1.442695
        %v242 = vpow.pop %v241
        %v243 = vmul.f32 %v238, 1.442695
        %v244 = vpow.pop %v243
        %v245 = vmul.f32 %v239, 1.442695
        %v246 = vpow.pop %v245
        %v247 = vmul.f32 %v240, 1.442695
        %v248 = vpow.pop %v247
        %v249 = vadd.f32 %v242, %v244
        %v250 = vadd.f32 %v249, %v246
        %v251 = vadd.f32 %v250, %v248
        %v252 = vrcp.pop %v251
        %v253 = vmul.f32 1.0, %v252
        %v254 = vmul.f32 %v242, %v253
        %v255 = vmul.f32 %v244, %v253
        %v256 = vmul.f32 %v246, %v253
        %v257 = vmul.f32 %v248, %v253
        %v258 = vlaneseq
        %v259 = vshrl.u32 %v258, 7
        %v260 = vlaneseq
        %v261 = vand.u32 %v260, 127
        %s262 = smul.u32 %s24, 8
        %v263 = vstv %s262
        %v264 = vadd.s32 %v263, %v259
        %v265 = vmul.u32 %v264, 128
        %v266 = vadd.s32 %v265, %v261
        %vm267 = vcmp.lt.s32.totalorder %v266, 256
        %v268 = vsel %vm267, 1, 0
        %vm269 = vcmp.eq.s32.totalorder %v268, 1
        %v270 = vsel %vm269, %v254, 0.0
        %v271 = vsel %vm269, %v255, 0.0
        %v272 = vsel %vm269, %v256, 0.0
        %v273 = vsel %vm269, %v257, 0.0
        %vm274 = vcmp.eq.s32.totalorder %v233, 0
        %v275 = vsel %vm274, %v270, 0.0
        %v276 = vsel %vm274, 1, 0
        %v277 = vcvt.s32.f32 %v276
        %v278 = vrot.slane %v275, 4
        %v279 = vadd.f32 %v275, %v278
        %v280 = vrot.slane %v279, 2
        %v281 = vadd.f32 %v279, %v280
        %v282 = vrot.slane %v281, 1
        %v283 = vadd.f32 %v281, %v282
        %v284 = vrot.slane %v277, 4
        %v285 = vadd.f32 %v277, %v284
        %v286 = vrot.slane %v285, 2
        %v287 = vadd.f32 %v285, %v286
        %v288 = vrot.slane %v287, 1
        %v289 = vadd.f32 %v287, %v288
        %v290 = vmul.f32 %v270, %v270
        %v291 = vrot.slane %v290, 4
        %v292 = vadd.f32 %v290, %v291
        %v293 = vrot.slane %v292, 2
        %v294 = vadd.f32 %v292, %v293
        %v295 = vrot.slane %v294, 1
        %v296 = vadd.f32 %v294, %v295
        %vm297 = vcmp.eq.s32.totalorder %v233, 1
        %v298 = vsel %vm297, %v271, 0.0
        %v299 = vsel %vm297, 1, 0
        %v300 = vcvt.s32.f32 %v299
        %v301 = vrot.slane %v298, 4
        %v302 = vadd.f32 %v298, %v301
        %v303 = vrot.slane %v302, 2
        %v304 = vadd.f32 %v302, %v303
        %v305 = vrot.slane %v304, 1
        %v306 = vadd.f32 %v304, %v305
        %v307 = vrot.slane %v300, 4
        %v308 = vadd.f32 %v300, %v307
        %v309 = vrot.slane %v308, 2
        %v310 = vadd.f32 %v308, %v309
        %v311 = vrot.slane %v310, 1
        %v312 = vadd.f32 %v310, %v311
        %v313 = vmul.f32 %v271, %v271
        %v314 = vrot.slane %v313, 4
        %v315 = vadd.f32 %v313, %v314
        %v316 = vrot.slane %v315, 2
        %v317 = vadd.f32 %v315, %v316
        %v318 = vrot.slane %v317, 1
        %v319 = vadd.f32 %v317, %v318
        %vm320 = vcmp.eq.s32.totalorder %v233, 2
        %v321 = vsel %vm320, %v272, 0.0
        %v322 = vsel %vm320, 1, 0
        %v323 = vcvt.s32.f32 %v322
        %v324 = vrot.slane %v321, 4
        %v325 = vadd.f32 %v321, %v324
        %v326 = vrot.slane %v325, 2
        %v327 = vadd.f32 %v325, %v326
        %v328 = vrot.slane %v327, 1
        %v329 = vadd.f32 %v327, %v328
        %v330 = vrot.slane %v323, 4
        %v331 = vadd.f32 %v323, %v330
        %v332 = vrot.slane %v331, 2
        %v333 = vadd.f32 %v331, %v332
        %v334 = vrot.slane %v333, 1
        %v335 = vadd.f32 %v333, %v334
        %v336 = vmul.f32 %v272, %v272
        %v337 = vrot.slane %v336, 4
        %v338 = vadd.f32 %v336, %v337
        %v339 = vrot.slane %v338, 2
        %v340 = vadd.f32 %v338, %v339
        %v341 = vrot.slane %v340, 1
        %v342 = vadd.f32 %v340, %v341
        %vm343 = vcmp.eq.s32.totalorder %v233, 3
        %v344 = vsel %vm343, %v273, 0.0
        %v345 = vsel %vm343, 1, 0
        %v346 = vcvt.s32.f32 %v345
        %v347 = vrot.slane %v344, 4
        %v348 = vadd.f32 %v344, %v347
        %v349 = vrot.slane %v348, 2
        %v350 = vadd.f32 %v348, %v349
        %v351 = vrot.slane %v350, 1
        %v352 = vadd.f32 %v350, %v351
        %v353 = vrot.slane %v346, 4
        %v354 = vadd.f32 %v346, %v353
        %v355 = vrot.slane %v354, 2
        %v356 = vadd.f32 %v354, %v355
        %v357 = vrot.slane %v356, 1
        %v358 = vadd.f32 %v356, %v357
        %v359 = vmul.f32 %v273, %v273
        %v360 = vrot.slane %v359, 4
        %v361 = vadd.f32 %v359, %v360
        %v362 = vrot.slane %v361, 2
        %v363 = vadd.f32 %v361, %v362
        %v364 = vrot.slane %v363, 1
        %v365 = vadd.f32 %v363, %v364
        %vm366 = vcmask 1040384
        %v367 = vsel %vm366, %v283, %v289
        %vm368 = vcmask 1041408
        %v369 = vsel %vm368, %v367, %v296
        %vm370 = vcmask 1042432
        %v371 = vsel %vm370, %v369, %v306
        %vm372 = vcmask 1043456
        %v373 = vsel %vm372, %v371, %v312
        %vm374 = vcmask 1044480
        %v375 = vsel %vm374, %v373, %v319
        %vm376 = vcmask 1045504
        %v377 = vsel %vm376, %v375, %v329
        %vm378 = vcmask 1046528
        %v379 = vsel %vm378, %v377, %v335
        %v380 = vsel %vm366, %v342, %v352
        %v381 = vsel %vm368, %v380, %v358
        %v382 = vsel %vm370, %v381, %v365
        %383 = vst [vmem:[%s228] sm:$0xff] %v379
        %384 = vst [vmem:[%s228 + $0x8] sm:$0xf] %v382
        %p385 = scmp.lt.s32.totalorder %s23, 1
        %s386 = scalar_select %p385, %s23, 1
        %p387 = scmp.lt.s32.totalorder %s24, 0
        %s388 = scalar_select %p387, %s24, 0
        %s389 = smul.addr %s388, 2
        %s390 = smul.addr %s386, 2
        %s391 = sadd.s32 %s389, %s390
        %s392 = smul.addr %s391, 8
        %s393 = scalar_lea.vmem %s2, %s392
        // Predicated region
        $region37: #{tpu_custom_call.1} parent=27 // pred_check
          %p394 = pneg %p107
        $region38: #{tpu_custom_call.1} parent=27 // pred_check_branch
          %396 = sbr.rel (%p394) target = $region40
        $region39: #{tpu_custom_call.1} parent=27 // pred_region
          _
        $region40: #{tpu_custom_call.1} parent=27 // pred_fallthru
          _
      $region28: #{tpu_custom_call.1} parent=5 // pred_fallthru
        _
      %p397 = scmp.le.s32.totalorder 2, %s14
      // Predicated region
      $region41: #{tpu_custom_call.1} parent=5 // pred_check
        %p398 = pneg %p397
      $region42: #{tpu_custom_call.1} parent=5 // pred_check_branch
        %400 = sbr.rel (%p398) target = $region44
      $region43: #{tpu_custom_call.1} parent=5 // pred_region
        %s401 = ssub.s32 %s14, 2
        // Predicated region
        $region45: #{tpu_custom_call.1} parent=43 // pred_check
          %p402 = pneg %p113
        $region46: #{tpu_custom_call.1} parent=43 // pred_check_branch
          %404 = sbr.rel (%p402) target = $region48
        $region47: #{tpu_custom_call.1} parent=43 // pred_region
          %p405 = scmp.lt.s32.totalorder %s25, 1
          %s406 = scalar_select %p405, %s25, 1
          %p407 = scmp.lt.s32.totalorder %s26, 0
          %s408 = scalar_select %p407, %s26, 0
          %s409 = smul.addr %s408, 2
          %s410 = smul.addr %s406, 2
          %s411 = sadd.s32 %s409, %s410
          %s412 = smul.addr %s411, 8
          %s413 = scalar_lea.vmem %s2, %s412
        $region48: #{tpu_custom_call.1} parent=43 // pred_fallthru
          _
      $region44: #{tpu_custom_call.1} parent=5 // pred_fallthru
        _
    $region6: #{tpu_custom_call.1} parent=1 // loop_footer
      %s18 = sadd.s32 1, %s14
    $region7: #{tpu_custom_call.1} parent=1 // loop_footer_branch
      %13 = sbr.rel target = $region3
    $region8: #{tpu_custom_call.1} parent=1 // loop_exit
      _
    %414 = vsyncpa [#allocation3], 1
    %s415 = scalar_lea.sflag [#allocation3], 1
    %416 = vsyncpa %s415, 1
    %417 = vsyncpa [#allocation5], 1
    %s418 = scalar_lea.sflag [#allocation5], 1
    %419 = vsyncpa %s418, 1

</llo_original>
